<compile_context>
chip_gen: v7x
topology: tpu7x:2x2x1
jax: 0.10.0
libtpu: 0.0.40
codegen_flags: <defaults>
</compile_context>

<pallas_src>
import functools

import jax
import jax.numpy as jnp
from jax.experimental import pallas as pl
from jax.experimental.pallas import tpu as pltpu


def find_multiple(n: int, k: int) -> int:
    if n % k == 0:
        return n
    return n + k - n % k


def _round_up(n: int, k: int) -> int:
    return (n + k - 1) // k * k


def _sublane(dtype) -> int:
    return {4: 8, 2: 16, 1: 32}.get(jnp.dtype(dtype).itemsize, 8)


def _vmem_capacity_bytes() -> int:
    try:
        return int(pltpu.get_tpu_info().vmem_capacity_bytes)
    except Exception:
        return 64 << 20            # conservative default: v7x per-TC VMEM


def _block_footprint_bytes(tm, th, d, x_bytes, w_bytes, out_bytes) -> int:
    # BlockSpec double-buffers every streamed block; the f32 accumulator
    # scratch is single-buffered.
    return (2 * (tm * d * x_bytes              # x tile
                 + d * 2 * th * w_bytes        # fused up+gate weight tile
                 + th * d * w_bytes            # out-proj weight tile
                 + tm * d * out_bytes)         # output tile
            + tm * d * 4)                      # f32 accumulator scratch


def _swiglu_kernel(x_ref, w_fused_ref, w_out_ref, o_ref, acc_ref, *,
                   th, compute_dtype):
    # x_ref:       (TM, D)     token tile, already in compute_dtype
    # w_fused_ref: (D, 2*TH)   [W_in^T | W_gate^T] column block (K-major, canonical)
    # w_out_ref:   (TH, D)     W_out^T row block
    # o_ref:       (TM, D)     output tile (resident across the hidden grid axis)
    # acc_ref:     (TM, D)     f32 accumulator scratch
    h_idx = pl.program_id(1)

    @pl.when(h_idx == 0)
    def _():
        acc_ref[...] = jnp.zeros_like(acc_ref)

    # Fused up + gate projection: one canonical (M,K)x(K,N) MXU pass.
    hg = jnp.dot(x_ref[...], w_fused_ref[...], preferred_element_type=jnp.float32)
    h_in = hg[:, :th]            # static lane slices at a multiple of 128
    h_gate = hg[:, th:]

    # SiLU + gating in f32 (EUP sigmoid + VPU mul).
    h = (h_in * jax.nn.sigmoid(h_in)) * h_gate

    # Partial out-projection, accumulated in f32 across the hidden axis.
    acc_ref[...] += jnp.dot(h.astype(compute_dtype), w_out_ref[...],
                            preferred_element_type=jnp.float32)

    @pl.when(h_idx == pl.num_programs(1) - 1)
    def _():
        o_ref[...] = acc_ref[...].astype(o_ref.dtype)


def mlp_swiglu_forward(x, w_in, w_gate, w_out, *, tm=512, th=512,
                       compute_dtype=None):
    """SwiGLU MLP forward.

    x: (..., D).  Weights in PyTorch nn.Linear (out_features, in_features) layout:
      w_in, w_gate: (H, D);  w_out: (D, H).
    compute_dtype: MXU operand dtype (x & weights converted once in the wrapper;
      accumulation is always f32).  Defaults to x.dtype.
    """
    orig_shape = x.shape
    D = orig_shape[-1]
    H = w_in.shape[0]
    assert w_in.shape == (H, D) and w_gate.shape == (H, D) and w_out.shape == (D, H)

    out_dtype = x.dtype
    if compute_dtype is None:
        compute_dtype = x.dtype
    compute_dtype = jnp.dtype(compute_dtype)

    x_bytes = compute_dtype.itemsize
    w_bytes = compute_dtype.itemsize
    out_bytes = jnp.dtype(out_dtype).itemsize
    sub = max(_sublane(compute_dtype), _sublane(out_dtype))

    xt = x.reshape(-1, D).astype(compute_dtype)        # tokens-major (T, D)
    T = xt.shape[0]

    # ---- generation-aware tile selection ------------------------------------
    budget = min(_vmem_capacity_bytes() * 3 // 4, 96 << 20)  # ~48 MiB v7x, ~96 MiB v5e/v6e

    tm = _round_up(min(tm, max(T, 1)), sub)
    th = max(128, min(_round_up(th, 128), _round_up(H, 128)))

    # Shrink tiles until the double-buffered footprint fits the VMEM budget.
    while _block_footprint_bytes(tm, th, D, x_bytes, w_bytes, out_bytes) > budget:
        if th > 128:
            th = max(128, (th // 2) // 128 * 128)
        elif tm > sub:
            tm = max(sub, _round_up(tm // 2, sub))
        else:
            break

    # Prefer an exact divisor of H (avoids padded hidden columns) when one
    # exists that is not much smaller than the budgeted tile.
    for d in range(th, 127, -128):
        if H % d == 0:
            if d >= max(128, th // 2):
                th = d
            break

    T_pad = _round_up(T, tm)
    H_pad = _round_up(H, th)
    n_h = H_pad // th

    if T_pad != T:
        xt = jnp.pad(xt, ((0, T_pad - T), (0, 0)))

    # ---- weight prep (once per call; production code would store this layout)
    w_in_t = w_in.T.astype(compute_dtype)       # (D, H)
    w_gate_t = w_gate.T.astype(compute_dtype)   # (D, H)
    w_out_t = w_out.T.astype(compute_dtype)     # (H, D)
    if H_pad != H:
        pad = H_pad - H
        w_in_t = jnp.pad(w_in_t, ((0, 0), (0, pad)))    # padded cols -> h_in = 0
        w_gate_t = jnp.pad(w_gate_t, ((0, 0), (0, pad)))
        w_out_t = jnp.pad(w_out_t, ((0, pad), (0, 0)))  # padded rows contribute 0
    # Interleave per-tile: fused block h = [W_in^T tile h | W_gate^T tile h].
    w_fused = jnp.concatenate(
        [w_in_t.reshape(D, n_h, th), w_gate_t.reshape(D, n_h, th)], axis=2
    ).reshape(D, 2 * H_pad)

    grid = (T_pad // tm, n_h)

    est = _block_footprint_bytes(tm, th, D, x_bytes, w_bytes, out_bytes)
    vmem_limit = int(min(max(est + (8 << 20), 32 << 20), budget))

    cost = pl.CostEstimate(
        flops=6 * T_pad * D * H_pad,
        transcendentals=T_pad * H_pad,
        bytes_accessed=(T_pad * D * x_bytes
                        + grid[0] * 3 * H_pad * D * w_bytes  # weights re-streamed per token tile
                        + T_pad * D * out_bytes),
    )

    out = pl.pallas_call(
        functools.partial(_swiglu_kernel, th=th, compute_dtype=compute_dtype),
        out_shape=jax.ShapeDtypeStruct((T_pad, D), out_dtype),
        grid_spec=pltpu.PrefetchScalarGridSpec(
            num_scalar_prefetch=0,
            grid=grid,
            in_specs=[
                pl.BlockSpec((tm, D), lambda i, h: (i, 0)),       # x tile (resident over h)
                pl.BlockSpec((D, 2 * th), lambda i, h: (0, h)),   # fused up+gate weight block
                pl.BlockSpec((th, D), lambda i, h: (h, 0)),       # out-proj weight block
            ],
            out_specs=pl.BlockSpec((tm, D), lambda i, h: (i, 0)),
            scratch_shapes=[pltpu.VMEM((tm, D), jnp.float32)],
        ),
        compiler_params=pltpu.CompilerParams(
            dimension_semantics=("parallel", "arbitrary"),
            vmem_limit_bytes=vmem_limit,
        ),
        cost_estimate=cost,
    )(xt, w_fused, w_out_t)

    if T_pad != T:
        out = out[:T]
    return out.reshape(orig_shape)


if __name__ == "__main__":
    # Small shapes consistent with the module:
    #   mlp_dim=256 -> hidden=1024 -> scaled=682 -> rounded (mult of 256)=768
    mlp_dim = 256
    hidden_dim = 4 * mlp_dim
    scaled_hidden = int(2 * hidden_dim / 3)
    rounded_hidden = find_multiple(scaled_hidden, 256)   # 768

    batch, seq = 2, 8

    key = jax.random.PRNGKey(0)
    k_x, k_in, k_gate, k_out = jax.random.split(key, 4)

    x = jax.random.normal(k_x, (batch, seq, mlp_dim), dtype=jnp.float32)

    # nn.Linear(in, out, bias=False) weight shape = (out_features, in_features)
    w_in = jax.random.normal(k_in, (rounded_hidden, mlp_dim),
                             dtype=jnp.float32) * (1.0 / mlp_dim ** 0.5)
    w_gate = jax.random.normal(k_gate, (rounded_hidden, mlp_dim),
                               dtype=jnp.float32) * (1.0 / mlp_dim ** 0.5)
    w_out = jax.random.normal(k_out, (mlp_dim, rounded_hidden),
                              dtype=jnp.float32) * (1.0 / rounded_hidden ** 0.5)

    # Pure-JAX reference (same math as the PyTorch module).
    h_ref = jax.nn.silu(x @ w_in.T) * (x @ w_gate.T)
    y_ref = h_ref @ w_out.T

    # f32 compute path — tight check.
    y = mlp_swiglu_forward(x, w_in, w_gate, w_out)
    jax.block_until_ready(y)
    assert y.shape == (batch, seq, mlp_dim)
    assert jnp.allclose(y, y_ref, atol=2e-4, rtol=2e-4)

    # bf16 MXU compute path — loose check (bf16 operand rounding).
    y_bf16 = mlp_swiglu_forward(x, w_in, w_gate, w_out,
                                compute_dtype=jnp.bfloat16)
    jax.block_until_ready(y_bf16)
    assert y_bf16.shape == (batch, seq, mlp_dim)
    assert jnp.allclose(y_bf16.astype(jnp.float32), y_ref, atol=1e-1, rtol=1e-1)

    # Ragged token count (exercises token-axis padding).
    x_r = jax.random.normal(k_x, (1, 5, mlp_dim), dtype=jnp.float32)
    y_r_ref = (jax.nn.silu(x_r @ w_in.T) * (x_r @ w_gate.T)) @ w_out.T
    y_r = mlp_swiglu_forward(x_r, w_in, w_gate, w_out)
    jax.block_until_ready(y_r)
    assert y_r.shape == (1, 5, mlp_dim)
    assert jnp.allclose(y_r, y_r_ref, atol=2e-4, rtol=2e-4)

    print("KERNEL_OK")
</pallas_src>

<mosaic_0001>
module attributes {stable_mosaic.version = 11 : i64} {
  func.func @_swiglu_kernel(%arg0: i32, %arg1: i32, %arg2: memref<16x256xf32, #tpu.memory_space<vmem>>, %arg3: memref<256x768xf32, #tpu.memory_space<vmem>>, %arg4: memref<384x256xf32, #tpu.memory_space<vmem>>, %arg5: memref<16x256xf32, #tpu.memory_space<vmem>>, %arg6: memref<16x256xf32, #tpu.memory_space<vmem>>) attributes {dimension_semantics = [#tpu.dimension_semantics<parallel>, #tpu.dimension_semantics<arbitrary>], iteration_bounds = array<i64: 1, 2>, scalar_prefetch = 0 : i64, scratch_operands = 1 : i64, tpu.core_type = #tpu.core_type<tc>, window_params = [{transform_indices = @transform_0, window_bounds = array<i64: 16, 256>}, {transform_indices = @transform_1, window_bounds = array<i64: 256, 768>}, {transform_indices = @transform_2, window_bounds = array<i64: 384, 256>}, {transform_indices = @transform_3, window_bounds = array<i64: 16, 256>}]} {
    %c0_i32 = arith.constant 0 : i32
    %0 = arith.cmpi eq, %arg1, %c0_i32 : i32
    %1 = arith.extui %0 : i1 to i32
    %c0_i32_0 = arith.constant 0 : i32
    %2 = arith.cmpi ne, %1, %c0_i32_0 : i32
    scf.if %2 {
      %cst_13 = arith.constant 0.000000e+00 : f32
      %23 = vector.broadcast %cst_13 : f32 to vector<16x256xf32>
      %c0_14 = arith.constant 0 : index
      %c0_15 = arith.constant 0 : index
      %24 = vector.load %arg6[%c0_14, %c0_15] : memref<16x256xf32, #tpu.memory_space<vmem>>, vector<16x256xf32>
      tpu.vector_store %arg6[%c0_14, %c0_15], %23 {strides = array<i32>} : memref<16x256xf32, #tpu.memory_space<vmem>>, vector<16x256xf32>,
    } else {
    }
    %c0 = arith.constant 0 : index
    %c0_1 = arith.constant 0 : index
    %3 = vector.load %arg2[%c0, %c0_1] : memref<16x256xf32, #tpu.memory_space<vmem>>, vector<16x256xf32>
    %c0_2 = arith.constant 0 : index
    %c0_3 = arith.constant 0 : index
    %4 = vector.load %arg3[%c0_2, %c0_3] : memref<256x768xf32, #tpu.memory_space<vmem>>, vector<256x768xf32>
    %cst = arith.constant dense<0.000000e+00> : vector<16x768xf32>
    %5 = tpu.matmul %3, %4, %cst {dimension_numbers = #tpu.dot_dimension_numbers<[1], [0], [0], [1], [0, 0, 1, 1], [], []>} : vector<16x256xf32>, vector<256x768xf32>, vector<16x768xf32> -> vector<16x768xf32>
    %6 = vector.extract_strided_slice %5 {offsets = [0, 0], sizes = [16, 384], strides = [1, 1]} : vector<16x768xf32> to vector<16x384xf32>
    %7 = vector.extract_strided_slice %5 {offsets = [0, 384], sizes = [16, 384], strides = [1, 1]} : vector<16x768xf32> to vector<16x384xf32>
    %8 = arith.negf %6 : vector<16x384xf32>
    %9 = math.exp %8 : vector<16x384xf32>
    %cst_4 = arith.constant 1.000000e+00 : f32
    %10 = vector.broadcast %cst_4 : f32 to vector<16x384xf32>
    %11 = arith.addf %10, %9 : vector<16x384xf32>
    %12 = arith.divf %10, %11 : vector<16x384xf32>
    %13 = arith.mulf %6, %12 : vector<16x384xf32>
    %14 = arith.mulf %13, %7 : vector<16x384xf32>
    %c0_5 = arith.constant 0 : index
    %c0_6 = arith.constant 0 : index
    %15 = vector.load %arg6[%c0_5, %c0_6] : memref<16x256xf32, #tpu.memory_space<vmem>>, vector<16x256xf32>
    %c0_7 = arith.constant 0 : index
    %c0_8 = arith.constant 0 : index
    %16 = vector.load %arg4[%c0_7, %c0_8] : memref<384x256xf32, #tpu.memory_space<vmem>>, vector<384x256xf32>
    %cst_9 = arith.constant dense<0.000000e+00> : vector<16x256xf32>
    %17 = tpu.matmul %14, %16, %cst_9 {dimension_numbers = #tpu.dot_dimension_numbers<[1], [0], [0], [1], [0, 0, 1, 1], [], []>} : vector<16x384xf32>, vector<384x256xf32>, vector<16x256xf32> -> vector<16x256xf32>
    %18 = arith.addf %15, %17 : vector<16x256xf32>
    %c0_10 = arith.constant 0 : index
    %c0_11 = arith.constant 0 : index
    %19 = vector.load %arg6[%c0_10, %c0_11] : memref<16x256xf32, #tpu.memory_space<vmem>>, vector<16x256xf32>
    tpu.vector_store %arg6[%c0_10, %c0_11], %18 {strides = array<i32>} : memref<16x256xf32, #tpu.memory_space<vmem>>, vector<16x256xf32>,
    %c1_i32 = arith.constant 1 : i32
    %20 = arith.cmpi eq, %arg1, %c1_i32 : i32
    %21 = arith.extui %20 : i1 to i32
    %c0_i32_12 = arith.constant 0 : i32
    %22 = arith.cmpi ne, %21, %c0_i32_12 : i32
    scf.if %22 {
      %c0_13 = arith.constant 0 : index
      %c0_14 = arith.constant 0 : index
      %23 = vector.load %arg6[%c0_13, %c0_14] : memref<16x256xf32, #tpu.memory_space<vmem>>, vector<16x256xf32>
      %c0_15 = arith.constant 0 : index
      %c0_16 = arith.constant 0 : index
      %24 = vector.load %arg5[%c0_15, %c0_16] : memref<16x256xf32, #tpu.memory_space<vmem>>, vector<16x256xf32>
      tpu.vector_store %arg5[%c0_15, %c0_16], %23 {strides = array<i32>} : memref<16x256xf32, #tpu.memory_space<vmem>>, vector<16x256xf32>,
    } else {
    }
    return
  }
  func.func @transform_0(%arg0: i32, %arg1: i32) -> (i32, i32) {
    %c0_i32 = arith.constant 0 : i32
    %c0_i32_0 = arith.constant 0 : i32
    return %arg0, %c0_i32 : i32, i32
  }
  func.func @transform_1(%arg0: i32, %arg1: i32) -> (i32, i32) {
    %c0_i32 = arith.constant 0 : i32
    %c0_i32_0 = arith.constant 0 : i32
    return %c0_i32, %arg1 : i32, i32
  }
  func.func @transform_2(%arg0: i32, %arg1: i32) -> (i32, i32) {
    %c0_i32 = arith.constant 0 : i32
    %c0_i32_0 = arith.constant 0 : i32
    return %arg1, %c0_i32 : i32, i32
  }
  func.func @transform_3(%arg0: i32, %arg1: i32) -> (i32, i32) {
    %c0_i32 = arith.constant 0 : i32
    %c0_i32_0 = arith.constant 0 : i32
    return %arg0, %c0_i32 : i32, i32
  }
}

</mosaic_0001>

<llo_original>
// kernel: tpu_custom_call.1
$region0: #{tpu_custom_call.1}
  #allocation0 [shape = 'u32[]', space=smem, size = 0x4, offset = 0x4, fixed_abs, tag = 'smem constant byte address 0x4 - core index']
  #allocation1 [shape = 'u32[144,128]{1,0:T(1,128)}', space=vmem, size = 0x12000, scoped, tag = 'internal scratch']
  #allocation2 [shape = 'f32[16,256]{1,0:T(8,128)}', space=vmem, size = 0x4000, scoped, tag = 'scratch operand']
  %s0 = inlined_call_operand.hbm [shape: f32[16,256], index: 0, kind: input, shape index: {}]
  %s1 = inlined_call_operand.hbm [shape: f32[256,1536], index: 1, kind: input, shape index: {}]
  %s2 = inlined_call_operand.hbm [shape: f32[768,256], index: 2, kind: input, shape index: {}]
  %s3 = inlined_call_operand.hbm [shape: f32[16,256], index: 3, kind: output, shape index: {}]
  %s4 = sld [smem:[#allocation0]]
  $region65: #{tpu_custom_call.1} parent=0
    _
  %s6 = ssub.s32 1, %s4
  %s7 = scalar_select 0, %s6, %s4
  $region1: #{tpu_custom_call.1} parent=0
    #allocation3 [shape = 'u8[16384]{0}', space=vmem, size = 0x4000, scoped, tag = 'input window, operand 0, single buffered']
    #allocation4 [shape = 's32[2]{0}', space=sflag, size = 0x8, scoped, tag = 'scoped memory for tpu_custom_call.1']
    #allocation5 [shape = 's32[2]{0}', space=sflag, size = 0x8, scoped, tag = 'scoped memory for tpu_custom_call.1']
    #allocation6 [shape = 'u8[1572864]{0}', space=vmem, size = 0x180000, scoped, tag = 'input window, operand 1']
    #allocation7 [shape = 's32[2]{0}', space=sflag, size = 0x8, scoped, tag = 'scoped memory for tpu_custom_call.1']
    #allocation8 [shape = 'u8[786432]{0}', space=vmem, size = 0xc0000, scoped, tag = 'input window, operand 2']
    #allocation9 [shape = 'u8[16384]{0}', space=vmem, size = 0x4000, scoped, tag = 'output window, operand 0, single buffered']
    %8 = vsyncpa [#allocation4], 0
    %9 = vsyncpa [#allocation7], 0
    %s10 = scalar_lea.sflag [#allocation7], 1
    %11 = vsyncpa %s10, 0
    %12 = vsyncpa [#allocation5], 0
    loop: start=0, step=1, limit=4
    $region2: #{tpu_custom_call.1} parent=1 // loop_pre_header
      _
    $region3: #{tpu_custom_call.1} parent=1 // loop_header
      %s14 = sphi 0, %s18
      %p15 = scmp.ge.s32.totalorder %s14, 4
      %s21 = sphi 0, %s33
      %s22 = sphi 0, %s29
      %s23 = sphi 0, %s21
      %s24 = sphi 0, %s22
      %s25 = sphi 0, %s23
      %s26 = sphi 0, %s24
      %s36 = sphi 0, %s38
      %s39 = sphi 0, %s36
      %s40 = sphi 0, %s39
      %s56 = sphi 0, %s40
      %s62 = sphi 0, %s64
      %s65 = sphi 0, %s62
      %s66 = sphi 0, %s65
      %s82 = sphi 0, %s66
      %s88 = sphi 0, %s90
      %s91 = sphi 0, %s88
      %s92 = sphi 0, %s91
      %s108 = sphi 0, %s92
      %s114 = sphi 0, %s116
      %s117 = sphi 0, %s114
      %s118 = sphi 0, %s117
      %s134 = sphi 0, %s118
    $region4: #{tpu_custom_call.1} parent=1 // loop_header_branch
      %17 = sbr.rel (%p15) target = $region8
    $region5: #{tpu_custom_call.1} parent=1 // loop_body
      %s19 = ssub.s32 %s14, 1
      %s20 = ssub.s32 %s14, 2
      %s27 = sadd.s32 1, %s22
      %p28 = scmp.ge.s32.totalorder %s27, 2
      %s29 = scalar_select %p28, 0, %s27
      %s30 = sadd.s32 1, %s21
      %s31 = scalar_select %p28, %s30, %s21
      %p32 = scmp.ge.s32.totalorder %s31, 1
      %s33 = scalar_select %p32, 0, %s31
      %s34 = ssub.s32 %s21, %s33
      %p35 = scmp.eq.s32.totalorder %s34, 0
      %s37 = sadd.s32 %s36, 1
      %s38 = scalar_select %p35, %s36, %s37
      %p41 = pneg %p35
      %p42 = scmp.eq.s32.totalorder %s14, 1
      %p43 = por %p41, %p42
      %p44 = scmp.ne.s32.totalorder %s36, %s39
      %p45 = scmp.eq.s32.totalorder %s14, 0
      %p46 = por %p44, %p45
      %p47 = scmp.ne.s32.totalorder %s36, %s39
      %p48 = scmp.eq.s32.totalorder %s19, 1
      %p49 = por %p47, %p48
      %p50 = scmp.ne.s32.totalorder %s39, %s40
      %p51 = scmp.eq.s32.totalorder %s19, 0
      %p52 = por %p50, %p51
      %p53 = scmp.ne.s32.totalorder %s39, %s40
      %p54 = scmp.eq.s32.totalorder %s20, 1
      %p55 = por %p53, %p54
      %p57 = scmp.ne.s32.totalorder %s40, %s56
      %p58 = scmp.eq.s32.totalorder %s20, 0
      %p59 = por %p57, %p58
      %s60 = ssub.s32 %s22, %s29
      %p61 = scmp.eq.s32.totalorder %s60, 0
      %s63 = sadd.s32 %s62, 1
      %s64 = scalar_select %p61, %s62, %s63
      %p67 = pneg %p61
      %p68 = scmp.eq.s32.totalorder %s14, 1
      %p69 = por %p67, %p68
      %p70 = scmp.ne.s32.totalorder %s62, %s65
      %p71 = scmp.eq.s32.totalorder %s14, 0
      %p72 = por %p70, %p71
      %p73 = scmp.ne.s32.totalorder %s62, %s65
      %p74 = scmp.eq.s32.totalorder %s19, 1
      %p75 = por %p73, %p74
      %p76 = scmp.ne.s32.totalorder %s65, %s66
      %p77 = scmp.eq.s32.totalorder %s19, 0
      %p78 = por %p76, %p77
      %p79 = scmp.ne.s32.totalorder %s65, %s66
      %p80 = scmp.eq.s32.totalorder %s20, 1
      %p81 = por %p79, %p80
      %p83 = scmp.ne.s32.totalorder %s66, %s82
      %p84 = scmp.eq.s32.totalorder %s20, 0
      %p85 = por %p83, %p84
      %s86 = ssub.s32 %s22, %s29
      %p87 = scmp.eq.s32.totalorder %s86, 0
      %s89 = sadd.s32 %s88, 1
      %s90 = scalar_select %p87, %s88, %s89
      %p93 = pneg %p87
      %p94 = scmp.eq.s32.totalorder %s14, 1
      %p95 = por %p93, %p94
      %p96 = scmp.ne.s32.totalorder %s88, %s91
      %p97 = scmp.eq.s32.totalorder %s14, 0
      %p98 = por %p96, %p97
      %p99 = scmp.ne.s32.totalorder %s88, %s91
      %p100 = scmp.eq.s32.totalorder %s19, 1
      %p101 = por %p99, %p100
      %p102 = scmp.ne.s32.totalorder %s91, %s92
      %p103 = scmp.eq.s32.totalorder %s19, 0
      %p104 = por %p102, %p103
      %p105 = scmp.ne.s32.totalorder %s91, %s92
      %p106 = scmp.eq.s32.totalorder %s20, 1
      %p107 = por %p105, %p106
      %p109 = scmp.ne.s32.totalorder %s92, %s108
      %p110 = scmp.eq.s32.totalorder %s20, 0
      %p111 = por %p109, %p110
      %s112 = ssub.s32 %s21, %s33
      %p113 = scmp.eq.s32.totalorder %s112, 0
      %s115 = sadd.s32 %s114, 1
      %s116 = scalar_select %p113, %s114, %s115
      %p119 = pneg %p113
      %p120 = scmp.eq.s32.totalorder %s14, 1
      %p121 = por %p119, %p120
      %p122 = scmp.ne.s32.totalorder %s114, %s117
      %p123 = scmp.eq.s32.totalorder %s14, 0
      %p124 = por %p122, %p123
      %p125 = scmp.ne.s32.totalorder %s114, %s117
      %p126 = scmp.eq.s32.totalorder %s19, 1
      %p127 = por %p125, %p126
      %p128 = scmp.ne.s32.totalorder %s117, %s118
      %p129 = scmp.eq.s32.totalorder %s19, 0
      %p130 = por %p128, %p129
      %p131 = scmp.ne.s32.totalorder %s117, %s118
      %p132 = scmp.eq.s32.totalorder %s20, 1
      %p133 = por %p131, %p132
      %p135 = scmp.ne.s32.totalorder %s118, %s134
      %p136 = scmp.eq.s32.totalorder %s20, 0
      %p137 = por %p135, %p136
      %p138 = scmp.le.s32.totalorder 1, %s14
      %p139 = scmp.lt.s32.totalorder %s14, 3
      %p140 = pnand %p138, %p139
      %p141 = pneg %p140
      // Predicated region
      $region9: #{tpu_custom_call.1} parent=5 // pred_check
        _
      $region10: #{tpu_custom_call.1} parent=5 // pred_check_branch
        %143 = sbr.rel (%p140) target = $region12
      $region11: #{tpu_custom_call.1} parent=5 // pred_region
        %s144 = ssub.s32 %s14, 1
        // Predicated region
        $region13: #{tpu_custom_call.1} parent=11 // pred_check
          %p145 = pneg %p52
        $region14: #{tpu_custom_call.1} parent=11 // pred_check_branch
          %147 = sbr.rel (%p145) target = $region16
        $region15: #{tpu_custom_call.1} parent=11 // pred_region
          %s148 = smul.u32 2, %s23
          %s150 = ssub.s32 512, 512
          %151 = vsyncadd [#allocation4], %s150
          %s152 = smul.addr %s148, 2
          %s153 = smul.addr %s152, 128
          %s154 = scalar_lea.hbm %s0, %s153
          %s155 = sshll.u32 [#allocation3], 4
          %s156 = int_to_ptr.vmem [resolvable:$true] %s155
          %161 = dma.hbm_to_vmem [thread:$0]  %s154, 512, %s156, [#allocation4], 256, 256, 16
        $region16: #{tpu_custom_call.1} parent=11 // pred_fallthru
          _
      $region12: #{tpu_custom_call.1} parent=5 // pred_fallthru
        _
      %p162 = scmp.lt.s32.totalorder %s14, 2
      // Predicated region
      $region17: #{tpu_custom_call.1} parent=5 // pred_check
        %p163 = pneg %p162
      $region18: #{tpu_custom_call.1} parent=5 // pred_check_branch
        %165 = sbr.rel (%p163) target = $region20
      $region19: #{tpu_custom_call.1} parent=5 // pred_region
        // Predicated region
        $region21: #{tpu_custom_call.1} parent=19 // pred_check
          %p166 = pneg %p72
        $region22: #{tpu_custom_call.1} parent=19 // pred_check_branch
          %168 = sbr.rel (%p166) target = $region24
        $region23: #{tpu_custom_call.1} parent=19 // pred_region
          %s169 = sand.u32 %s14, 1
          %s170 = scalar_lea.sflag [#allocation7], %s169
          %s171 = sand.u32 %s62, 1
          %s172 = smul.addr %s171, 1536
          %s173 = scalar_lea.vmem [#allocation6], %s172
          %s174 = smul.u32 6, %s22
          %s176 = ssub.s32 24576, 24576
          %177 = vsyncadd %s170, %s176
          %s178 = smul.addr %s174, 128
          %s179 = scalar_lea.hbm %s1, %s178
          %s180 = sshll.u32 %s173, 4
          %s181 = int_to_ptr.vmem [resolvable:$true] %s180
          %186 = dma.hbm_to_vmem [thread:$0]  %s179, 24576, %s181, %s170, 1536, 768, 48
        $region24: #{tpu_custom_call.1} parent=19 // pred_fallthru
          _
        // Predicated region
        $region25: #{tpu_custom_call.1} parent=19 // pred_check
          %p187 = pneg %p98
        $region26: #{tpu_custom_call.1} parent=19 // pred_check_branch
          %189 = sbr.rel (%p187) target = $region28
        $region27: #{tpu_custom_call.1} parent=19 // pred_region
          %s190 = sand.u32 %s14, 1
          %s191 = scalar_lea.sflag [#allocation7], %s190
          %s192 = sand.u32 %s88, 1
          %s193 = smul.addr %s192, 768
          %s194 = scalar_lea.vmem [#allocation8], %s193
          %s195 = smul.u32 48, %s22
          %s197 = ssub.s32 12288, 12288
          %198 = vsyncadd %s191, %s197
          %s199 = smul.addr %s195, 2
          %s200 = smul.addr %s199, 128
          %s201 = scalar_lea.hbm %s2, %s200
          %s202 = sshll.u32 %s194, 4
          %s203 = int_to_ptr.vmem [resolvable:$true] %s202
          %208 = dma.hbm_to_vmem [thread:$0]  %s201, 12288, %s203, %s191, 256, 256, 16
        $region28: #{tpu_custom_call.1} parent=19 // pred_fallthru
          _
      $region20: #{tpu_custom_call.1} parent=5 // pred_fallthru
        _
      %p209 = scmp.le.s32.totalorder 1, %s14
      %p210 = scmp.lt.s32.totalorder %s14, 3
      %p211 = pnand %p209, %p210
      %p212 = pneg %p211
      // Predicated region
      $region29: #{tpu_custom_call.1} parent=5 // pred_check
        _
      $region30: #{tpu_custom_call.1} parent=5 // pred_check_branch
        %214 = sbr.rel (%p211) target = $region32
      $region31: #{tpu_custom_call.1} parent=5 // pred_region
        %s215 = ssub.s32 %s14, 1
        // Predicated region
        $region33: #{tpu_custom_call.1} parent=31 // pred_check
          %p216 = pneg %p52
        $region34: #{tpu_custom_call.1} parent=31 // pred_check_branch
          %218 = sbr.rel (%p216) target = $region36
        $region35: #{tpu_custom_call.1} parent=31 // pred_region
          %219 = dma.done [#allocation4], 512
        $region36: #{tpu_custom_call.1} parent=31 // pred_fallthru
          _
        %s220 = sand.u32 %s19, 1
        %s221 = scalar_lea.sflag [#allocation7], %s220
        %s222 = sand.u32 %s65, 1
        %s223 = smul.addr %s222, 1536
        %s224 = scalar_lea.vmem [#allocation6], %s223
        // Predicated region
        $region37: #{tpu_custom_call.1} parent=31 // pred_check
          %p225 = pneg %p78
        $region38: #{tpu_custom_call.1} parent=31 // pred_check_branch
          %227 = sbr.rel (%p225) target = $region40
        $region39: #{tpu_custom_call.1} parent=31 // pred_region
          %228 = dma.done %s221, 24576
        $region40: #{tpu_custom_call.1} parent=31 // pred_fallthru
          _
        %s229 = sand.u32 %s19, 1
        %s230 = scalar_lea.sflag [#allocation7], %s229
        %s231 = sand.u32 %s91, 1
        %s232 = smul.addr %s231, 768
        %s233 = scalar_lea.vmem [#allocation8], %s232
        // Predicated region
        $region41: #{tpu_custom_call.1} parent=31 // pred_check
          %p234 = pneg %p104
        $region42: #{tpu_custom_call.1} parent=31 // pred_check_branch
          %236 = sbr.rel (%p234) target = $region44
        $region43: #{tpu_custom_call.1} parent=31 // pred_region
          %237 = dma.done %s230, 12288
        $region44: #{tpu_custom_call.1} parent=31 // pred_fallthru
          _
        %p238 = pneg %p52
        %p239 = pneg %p49
        %s240 = sand.u32 %s19, 1
        %s241 = scalar_lea.sflag [#allocation7], %s240
        %s242 = sand.u32 %s65, 1
        %s243 = smul.addr %s242, 1536
        %s244 = scalar_lea.vmem [#allocation6], %s243
        %p245 = pneg %p78
        %p246 = pneg %p75
        %s247 = sand.u32 %s19, 1
        %s248 = scalar_lea.sflag [#allocation7], %s247
        %s249 = sand.u32 %s91, 1
        %s250 = smul.addr %s249, 768
        %s251 = scalar_lea.vmem [#allocation8], %s250
        %p252 = pneg %p104
        %p253 = pneg %p101
        %p254 = pneg %p130
        %p255 = pneg %p127
        %s256 = smul.u32 2, %s23
        %s257 = smul.u32 6, %s24
        %s258 = smul.u32 48, %s24
        %s259 = smul.u32 2, %s23
        %p260 = scmp.eq.s32.totalorder %s24, 0
        // Predicated region
        $region45: #{tpu_custom_call.1} parent=31 // pred_check
          %p261 = pneg %p260
        $region46: #{tpu_custom_call.1} parent=31 // pred_check_branch
          %263 = sbr.rel (%p261) target = $region48
        $region47: #{tpu_custom_call.1} parent=31 // pred_region
          %264 = vst [vmem:[#allocation2] sm:$0xff] 0.0
          %265 = vst [vmem:[#allocation2 + $0x8] sm:$0xff] 0.0
          %266 = vst [vmem:[#allocation2 + $0x10] sm:$0xff] 0.0
          %267 = vst [vmem:[#allocation2 + $0x18] sm:$0xff] 0.0
        $region48: #{tpu_custom_call.1} parent=31 // pred_fallthru
          _
        %v268 = vld [vmem:[#allocation3] sm:$0xff]
        %v269 = vld [vmem:[#allocation3 + $0x8] sm:$0xff]
        %v270 = vld [vmem:[#allocation3 + $0x10] sm:$0xff]
        %v271 = vld [vmem:[#allocation3 + $0x18] sm:$0xff]
        %v272 = vld [vmem:[%s224] sm:$0xff]
        %v273 = vld [vmem:[%s224 + $0x8] sm:$0xff]
        %v274 = vld [vmem:[%s224 + $0x10] sm:$0xff]
        %v275 = vld [vmem:[%s224 + $0x18] sm:$0xff]
        %v276 = vld [vmem:[%s224 + $0x20] sm:$0xff]
        %v277 = vld [vmem:[%s224 + $0x28] sm:$0xff]
        %v278 = vld [vmem:[%s224 + $0x30] sm:$0xff]
        %v279 = vld [vmem:[%s224 + $0x38] sm:$0xff]
        %v280 = vld [vmem:[%s224 + $0x40] sm:$0xff]
        %v281 = vld [vmem:[%s224 + $0x48] sm:$0xff]
        %v282 = vld [vmem:[%s224 + $0x50] sm:$0xff]
        %v283 = vld [vmem:[%s224 + $0x58] sm:$0xff]
        %v284 = vld [vmem:[%s224 + $0x60] sm:$0xff]
        %v285 = vld [vmem:[%s224 + $0x68] sm:$0xff]
        %v286 = vld [vmem:[%s224 + $0x70] sm:$0xff]
        %v287 = vld [vmem:[%s224 + $0x78] sm:$0xff]
        %v288 = vld [vmem:[%s224 + $0x80] sm:$0xff]
        %v289 = vld [vmem:[%s224 + $0x88] sm:$0xff]
        %v290 = vld [vmem:[%s224 + $0x90] sm:$0xff]
        %v291 = vld [vmem:[%s224 + $0x98] sm:$0xff]
        %v292 = vld [vmem:[%s224 + $0xa0] sm:$0xff]
        %v293 = vld [vmem:[%s224 + $0xa8] sm:$0xff]
        %v294 = vld [vmem:[%s224 + $0xb0] sm:$0xff]
        %v295 = vld [vmem:[%s224 + $0xb8] sm:$0xff]
        %v296 = vld [vmem:[%s224 + $0xc0] sm:$0xff]
        %v297 = vld [vmem:[%s224 + $0xc8] sm:$0xff]
        %v298 = vld [vmem:[%s224 + $0xd0] sm:$0xff]
        %v299 = vld [vmem:[%s224 + $0xd8] sm:$0xff]
        %v300 = vld [vmem:[%s224 + $0xe0] sm:$0xff]
        %v301 = vld [vmem:[%s224 + $0xe8] sm:$0xff]
        %v302 = vld [vmem:[%s224 + $0xf0] sm:$0xff]
        %v303 = vld [vmem:[%s224 + $0xf8] sm:$0xff]
        %v304 = vld [vmem:[%s224 + $0x100] sm:$0xff]
        %v305 = vld [vmem:[%s224 + $0x108] sm:$0xff]
        %v306 = vld [vmem:[%s224 + $0x110] sm:$0xff]
        %v307 = vld [vmem:[%s224 + $0x118] sm:$0xff]
        %v308 = vld [vmem:[%s224 + $0x120] sm:$0xff]
        %v309 = vld [vmem:[%s224 + $0x128] sm:$0xff]
        %v310 = vld [vmem:[%s224 + $0x130] sm:$0xff]
        %v311 = vld [vmem:[%s224 + $0x138] sm:$0xff]
        %v312 = vld [vmem:[%s224 + $0x140] sm:$0xff]
        %v313 = vld [vmem:[%s224 + $0x148] sm:$0xff]
        %v314 = vld [vmem:[%s224 + $0x150] sm:$0xff]
        %v315 = vld [vmem:[%s224 + $0x158] sm:$0xff]
        %v316 = vld [vmem:[%s224 + $0x160] sm:$0xff]
        %v317 = vld [vmem:[%s224 + $0x168] sm:$0xff]
        %v318 = vld [vmem:[%s224 + $0x170] sm:$0xff]
        %v319 = vld [vmem:[%s224 + $0x178] sm:$0xff]
        %v320 = vld [vmem:[%s224 + $0x180] sm:$0xff]
        %v321 = vld [vmem:[%s224 + $0x188] sm:$0xff]
        %v322 = vld [vmem:[%s224 + $0x190] sm:$0xff]
        %v323 = vld [vmem:[%s224 + $0x198] sm:$0xff]
        %v324 = vld [vmem:[%s224 + $0x1a0] sm:$0xff]
        %v325 = vld [vmem:[%s224 + $0x1a8] sm:$0xff]
        %v326 = vld [vmem:[%s224 + $0x1b0] sm:$0xff]
        %v327 = vld [vmem:[%s224 + $0x1b8] sm:$0xff]
        %v328 = vld [vmem:[%s224 + $0x1c0] sm:$0xff]
        %v329 = vld [vmem:[%s224 + $0x1c8] sm:$0xff]
        %v330 = vld [vmem:[%s224 + $0x1d0] sm:$0xff]
        %v331 = vld [vmem:[%s224 + $0x1d8] sm:$0xff]
        %v332 = vld [vmem:[%s224 + $0x1e0] sm:$0xff]
        %v333 = vld [vmem:[%s224 + $0x1e8] sm:$0xff]
        %v334 = vld [vmem:[%s224 + $0x1f0] sm:$0xff]
        %v335 = vld [vmem:[%s224 + $0x1f8] sm:$0xff]
        %v336 = vld [vmem:[%s224 + $0x200] sm:$0xff]
        %v337 = vld [vmem:[%s224 + $0x208] sm:$0xff]
        %v338 = vld [vmem:[%s224 + $0x210] sm:$0xff]
        %v339 = vld [vmem:[%s224 + $0x218] sm:$0xff]
        %v340 = vld [vmem:[%s224 + $0x220] sm:$0xff]
        %v341 = vld [vmem:[%s224 + $0x228] sm:$0xff]
        %v342 = vld [vmem:[%s224 + $0x230] sm:$0xff]
        %v343 = vld [vmem:[%s224 + $0x238] sm:$0xff]
        %v344 = vld [vmem:[%s224 + $0x240] sm:$0xff]
        %v345 = vld [vmem:[%s224 + $0x248] sm:$0xff]
        %v346 = vld [vmem:[%s224 + $0x250] sm:$0xff]
        %v347 = vld [vmem:[%s224 + $0x258] sm:$0xff]
        %v348 = vld [vmem:[%s224 + $0x260] sm:$0xff]
        %v349 = vld [vmem:[%s224 + $0x268] sm:$0xff]
        %v350 = vld [vmem:[%s224 + $0x270] sm:$0xff]
        %v351 = vld [vmem:[%s224 + $0x278] sm:$0xff]
        %v352 = vld [vmem:[%s224 + $0x280] sm:$0xff]
        %v353 = vld [vmem:[%s224 + $0x288] sm:$0xff]
        %v354 = vld [vmem:[%s224 + $0x290] sm:$0xff]
        %v355 = vld [vmem:[%s224 + $0x298] sm:$0xff]
        %v356 = vld [vmem:[%s224 + $0x2a0] sm:$0xff]
        %v357 = vld [vmem:[%s224 + $0x2a8] sm:$0xff]
        %v358 = vld [vmem:[%s224 + $0x2b0] sm:$0xff]
        %v359 = vld [vmem:[%s224 + $0x2b8] sm:$0xff]
        %v360 = vld [vmem:[%s224 + $0x2c0] sm:$0xff]
        %v361 = vld [vmem:[%s224 + $0x2c8] sm:$0xff]
        %v362 = vld [vmem:[%s224 + $0x2d0] sm:$0xff]
        %v363 = vld [vmem:[%s224 + $0x2d8] sm:$0xff]
        %v364 = vld [vmem:[%s224 + $0x2e0] sm:$0xff]
        %v365 = vld [vmem:[%s224 + $0x2e8] sm:$0xff]
        %v366 = vld [vmem:[%s224 + $0x2f0] sm:$0xff]
        %v367 = vld [vmem:[%s224 + $0x2f8] sm:$0xff]
        %v368 = vld [vmem:[%s224 + $0x300] sm:$0xff]
        %v369 = vld [vmem:[%s224 + $0x308] sm:$0xff]
        %v370 = vld [vmem:[%s224 + $0x310] sm:$0xff]
        %v371 = vld [vmem:[%s224 + $0x318] sm:$0xff]
        %v372 = vld [vmem:[%s224 + $0x320] sm:$0xff]
        %v373 = vld [vmem:[%s224 + $0x328] sm:$0xff]
        %v374 = vld [vmem:[%s224 + $0x330] sm:$0xff]
        %v375 = vld [vmem:[%s224 + $0x338] sm:$0xff]
        %v376 = vld [vmem:[%s224 + $0x340] sm:$0xff]
        %v377 = vld [vmem:[%s224 + $0x348] sm:$0xff]
        %v378 = vld [vmem:[%s224 + $0x350] sm:$0xff]
        %v379 = vld [vmem:[%s224 + $0x358] sm:$0xff]
        %v380 = vld [vmem:[%s224 + $0x360] sm:$0xff]
        %v381 = vld [vmem:[%s224 + $0x368] sm:$0xff]
        %v382 = vld [vmem:[%s224 + $0x370] sm:$0xff]
        %v383 = vld [vmem:[%s224 + $0x378] sm:$0xff]
        %v384 = vld [vmem:[%s224 + $0x380] sm:$0xff]
        %v385 = vld [vmem:[%s224 + $0x388] sm:$0xff]
        %v386 = vld [vmem:[%s224 + $0x390] sm:$0xff]
        %v387 = vld [vmem:[%s224 + $0x398] sm:$0xff]
        %v388 = vld [vmem:[%s224 + $0x3a0] sm:$0xff]
        %v389 = vld [vmem:[%s224 + $0x3a8] sm:$0xff]
        %v390 = vld [vmem:[%s224 + $0x3b0] sm:$0xff]
        %v391 = vld [vmem:[%s224 + $0x3b8] sm:$0xff]
        %v392 = vld [vmem:[%s224 + $0x3c0] sm:$0xff]
        %v393 = vld [vmem:[%s224 + $0x3c8] sm:$0xff]
        %v394 = vld [vmem:[%s224 + $0x3d0] sm:$0xff]
        %v395 = vld [vmem:[%s224 + $0x3d8] sm:$0xff]
        %v396 = vld [vmem:[%s224 + $0x3e0] sm:$0xff]
        %v397 = vld [vmem:[%s224 + $0x3e8] sm:$0xff]
        %v398 = vld [vmem:[%s224 + $0x3f0] sm:$0xff]
        %v399 = vld [vmem:[%s224 + $0x3f8] sm:$0xff]
        %v400 = vld [vmem:[%s224 + $0x400] sm:$0xff]
        %v401 = vld [vmem:[%s224 + $0x408] sm:$0xff]
        %v402 = vld [vmem:[%s224 + $0x410] sm:$0xff]
        %v403 = vld [vmem:[%s224 + $0x418] sm:$0xff]
        %v404 = vld [vmem:[%s224 + $0x420] sm:$0xff]
        %v405 = vld [vmem:[%s224 + $0x428] sm:$0xff]
        %v406 = vld [vmem:[%s224 + $0x430] sm:$0xff]
        %v407 = vld [vmem:[%s224 + $0x438] sm:$0xff]
        %v408 = vld [vmem:[%s224 + $0x440] sm:$0xff]
        %v409 = vld [vmem:[%s224 + $0x448] sm:$0xff]
        %v410 = vld [vmem:[%s224 + $0x450] sm:$0xff]
        %v411 = vld [vmem:[%s224 + $0x458] sm:$0xff]
        %v412 = vld [vmem:[%s224 + $0x460] sm:$0xff]
        %v413 = vld [vmem:[%s224 + $0x468] sm:$0xff]
        %v414 = vld [vmem:[%s224 + $0x470] sm:$0xff]
        %v415 = vld [vmem:[%s224 + $0x478] sm:$0xff]
        %v416 = vld [vmem:[%s224 + $0x480] sm:$0xff]
        %v417 = vld [vmem:[%s224 + $0x488] sm:$0xff]
        %v418 = vld [vmem:[%s224 + $0x490] sm:$0xff]
        %v419 = vld [vmem:[%s224 + $0x498] sm:$0xff]
        %v420 = vld [vmem:[%s224 + $0x4a0] sm:$0xff]
        %v421 = vld [vmem:[%s224 + $0x4a8] sm:$0xff]
        %v422 = vld [vmem:[%s224 + $0x4b0] sm:$0xff]
        %v423 = vld [vmem:[%s224 + $0x4b8] sm:$0xff]
        %v424 = vld [vmem:[%s224 + $0x4c0] sm:$0xff]
        %v425 = vld [vmem:[%s224 + $0x4c8] sm:$0xff]
        %v426 = vld [vmem:[%s224 + $0x4d0] sm:$0xff]
        %v427 = vld [vmem:[%s224 + $0x4d8] sm:$0xff]
        %v428 = vld [vmem:[%s224 + $0x4e0] sm:$0xff]
        %v429 = vld [vmem:[%s224 + $0x4e8] sm:$0xff]
        %v430 = vld [vmem:[%s224 + $0x4f0] sm:$0xff]
        %v431 = vld [vmem:[%s224 + $0x4f8] sm:$0xff]
        %v432 = vld [vmem:[%s224 + $0x500] sm:$0xff]
        %v433 = vld [vmem:[%s224 + $0x508] sm:$0xff]
        %v434 = vld [vmem:[%s224 + $0x510] sm:$0xff]
        %v435 = vld [vmem:[%s224 + $0x518] sm:$0xff]
        %v436 = vld [vmem:[%s224 + $0x520] sm:$0xff]
        %v437 = vld [vmem:[%s224 + $0x528] sm:$0xff]
        %v438 = vld [vmem:[%s224 + $0x530] sm:$0xff]
        %v439 = vld [vmem:[%s224 + $0x538] sm:$0xff]
        %v440 = vld [vmem:[%s224 + $0x540] sm:$0xff]
        %v441 = vld [vmem:[%s224 + $0x548] sm:$0xff]
        %v442 = vld [vmem:[%s224 + $0x550] sm:$0xff]
        %v443 = vld [vmem:[%s224 + $0x558] sm:$0xff]
        %v444 = vld [vmem:[%s224 + $0x560] sm:$0xff]
        %v445 = vld [vmem:[%s224 + $0x568] sm:$0xff]
        %v446 = vld [vmem:[%s224 + $0x570] sm:$0xff]
        %v447 = vld [vmem:[%s224 + $0x578] sm:$0xff]
        %v448 = vld [vmem:[%s224 + $0x580] sm:$0xff]
        %v449 = vld [vmem:[%s224 + $0x588] sm:$0xff]
        %v450 = vld [vmem:[%s224 + $0x590] sm:$0xff]
        %v451 = vld [vmem:[%s224 + $0x598] sm:$0xff]
        %v452 = vld [vmem:[%s224 + $0x5a0] sm:$0xff]
        %v453 = vld [vmem:[%s224 + $0x5a8] sm:$0xff]
        %v454 = vld [vmem:[%s224 + $0x5b0] sm:$0xff]
        %v455 = vld [vmem:[%s224 + $0x5b8] sm:$0xff]
        %v456 = vld [vmem:[%s224 + $0x5c0] sm:$0xff]
        %v457 = vld [vmem:[%s224 + $0x5c8] sm:$0xff]
        %v458 = vld [vmem:[%s224 + $0x5d0] sm:$0xff]
        %v459 = vld [vmem:[%s224 + $0x5d8] sm:$0xff]
        %v460 = vld [vmem:[%s224 + $0x5e0] sm:$0xff]
        %v461 = vld [vmem:[%s224 + $0x5e8] sm:$0xff]
        %v462 = vld [vmem:[%s224 + $0x5f0] sm:$0xff]
        %v463 = vld [vmem:[%s224 + $0x5f8] sm:$0xff]
        %464 = vmatprep.subr.mxu0 %v273
        %465 = vmatpush1.msra.mxu0 %v272
        %466 = vmatprep.subr.mxu0 %v279
        %467 = vmatpush1.msra.mxu0 %v278
        %468 = vmatprep.subr.mxu0 %v285
        %469 = vmatpush1.msra.mxu0 %v284
        %470 = vmatprep.subr.mxu0 %v291
        %471 = vmatpush1.msra.mxu0 %v290
        %472 = vmatprep.subr.mxu0 %v297
        %473 = vmatpush1.msra.mxu0 %v296
        %474 = vmatprep.subr.mxu0 %v303
        %475 = vmatpush1.msra.mxu0 %v302
        %476 = vmatprep.subr.mxu0 %v309
        %477 = vmatpush1.msra.mxu0 %v308
        %478 = vmatprep.subr.mxu0 %v315
        %479 = vmatpush1.msra.mxu0 %v314
        %480 = vmatprep.subr.mxu0 %v321
        %481 = vmatpush1.msra.mxu0 %v320
        %482 = vmatprep.subr.mxu0 %v327
        %483 = vmatpush1.msra.mxu0 %v326
        %484 = vmatprep.subr.mxu0 %v333
        %485 = vmatpush1.msra.mxu0 %v332
        %486 = vmatprep.subr.mxu0 %v339
        %487 = vmatpush1.msra.mxu0 %v338
        %488 = vmatprep.subr.mxu0 %v345
        %489 = vmatpush1.msra.mxu0 %v344
        %490 = vmatprep.subr.mxu0 %v351
        %491 = vmatpush1.msra.mxu0 %v350
        %492 = vmatprep.subr.mxu0 %v357
        %493 = vmatpush1.msra.mxu0 %v356
        %494 = vmatprep.subr.mxu0 %v363
        %495 = vmatpush1.msra.mxu0 %v362
        %496 = vmatprep.subr.mxu0 %v369
        %497 = vmatpush1.msra.mxu0 %v368
        %498 = vmatprep.subr.mxu0 %v375
        %499 = vmatpush1.msra.mxu0 %v374
        %500 = vmatprep.subr.mxu0 %v381
        %501 = vmatpush1.msra.mxu0 %v380
        %502 = vmatprep.subr.mxu0 %v387
        %503 = vmatpush1.msra.mxu0 %v386
        %504 = vmatprep.subr.mxu0 %v393
        %505 = vmatpush1.msra.mxu0 %v392
        %506 = vmatprep.subr.mxu0 %v399
        %507 = vmatpush1.msra.mxu0 %v398
        %508 = vmatprep.subr.mxu0 %v405
        %509 = vmatpush1.msra.mxu0 %v404
        %510 = vmatprep.subr.mxu0 %v411
        %511 = vmatpush1.msra.mxu0 %v410
        %512 = vmatprep.subr.mxu0 %v417
        %513 = vmatpush1.msra.mxu0 %v416
        %514 = vmatprep.subr.mxu0 %v423
        %515 = vmatpush1.msra.mxu0 %v422
        %516 = vmatprep.subr.mxu0 %v429
        %517 = vmatpush1.msra.mxu0 %v428
        %518 = vmatprep.subr.mxu0 %v435
        %519 = vmatpush1.msra.mxu0 %v434
        %520 = vmatprep.subr.mxu0 %v441
        %521 = vmatpush1.msra.mxu0 %v440
        %522 = vmatprep.subr.mxu0 %v447
        %523 = vmatpush1.msra.mxu0 %v446
        %524 = vmatprep.subr.mxu0 %v453
        %525 = vmatpush1.msra.mxu0 %v452
        %526 = vmatprep.subr.mxu0 %v459
        %527 = vmatpush1.msra.mxu0 %v458
        %528 = vmatprep.mubr.f32.mxu0 %v269
        %529 = vmatmul.mubr.f32.gmra.mrb[0].mxu0 %v268
        %v530 = vpop.f32.mrb[0].mxu0
        %v531 = vadd.f32 0.0, %v530
        %v532 = vpop.f32.mrb[0].mxu0
        %v533 = vadd.f32 0.0, %v532
        %534 = vmatprep.mubr.f32.mxu0 %v271
        %535 = vmatmul.mubr.f32.gmra.mrb[0].mxu0 %v270
        %v536 = vpop.f32.mrb[0].mxu0
        %v537 = vadd.f32 0.0, %v536
        %v538 = vpop.f32.mrb[0].mxu0
        %v539 = vadd.f32 0.0, %v538
        %540 = vdwg.mxu0
        %541 = vmatprep.subr.mxu0 %v275
        %542 = vmatpush1.msra.mxu0 %v274
        %543 = vmatprep.subr.mxu0 %v281
        %544 = vmatpush1.msra.mxu0 %v280
        %545 = vmatprep.subr.mxu0 %v287
        %546 = vmatpush1.msra.mxu0 %v286
        %547 = vmatprep.subr.mxu0 %v293
        %548 = vmatpush1.msra.mxu0 %v292
        %549 = vmatprep.subr.mxu0 %v299
        %550 = vmatpush1.msra.mxu0 %v298
        %551 = vmatprep.subr.mxu0 %v305
        %552 = vmatpush1.msra.mxu0 %v304
        %553 = vmatprep.subr.mxu0 %v311
        %554 = vmatpush1.msra.mxu0 %v310
        %555 = vmatprep.subr.mxu0 %v317
        %556 = vmatpush1.msra.mxu0 %v316
        %557 = vmatprep.subr.mxu0 %v323
        %558 = vmatpush1.msra.mxu0 %v322
        %559 = vmatprep.subr.mxu0 %v329
        %560 = vmatpush1.msra.mxu0 %v328
        %561 = vmatprep.subr.mxu0 %v335
        %562 = vmatpush1.msra.mxu0 %v334
        %563 = vmatprep.subr.mxu0 %v341
        %564 = vmatpush1.msra.mxu0 %v340
        %565 = vmatprep.subr.mxu0 %v347
        %566 = vmatpush1.msra.mxu0 %v346
        %567 = vmatprep.subr.mxu0 %v353
        %568 = vmatpush1.msra.mxu0 %v352
        %569 = vmatprep.subr.mxu0 %v359
        %570 = vmatpush1.msra.mxu0 %v358
        %571 = vmatprep.subr.mxu0 %v365
        %572 = vmatpush1.msra.mxu0 %v364
        %573 = vmatprep.subr.mxu0 %v371
        %574 = vmatpush1.msra.mxu0 %v370
        %575 = vmatprep.subr.mxu0 %v377
        %576 = vmatpush1.msra.mxu0 %v376
        %577 = vmatprep.subr.mxu0 %v383
        %578 = vmatpush1.msra.mxu0 %v382
        %579 = vmatprep.subr.mxu0 %v389
        %580 = vmatpush1.msra.mxu0 %v388
        %581 = vmatprep.subr.mxu0 %v395
        %582 = vmatpush1.msra.mxu0 %v394
        %583 = vmatprep.subr.mxu0 %v401
        %584 = vmatpush1.msra.mxu0 %v400
        %585 = vmatprep.subr.mxu0 %v407
        %586 = vmatpush1.msra.mxu0 %v406
        %587 = vmatprep.subr.mxu0 %v413
        %588 = vmatpush1.msra.mxu0 %v412
        %589 = vmatprep.subr.mxu0 %v419
        %590 = vmatpush1.msra.mxu0 %v418
        %591 = vmatprep.subr.mxu0 %v425
        %592 = vmatpush1.msra.mxu0 %v424
        %593 = vmatprep.subr.mxu0 %v431
        %594 = vmatpush1.msra.mxu0 %v430
        %595 = vmatprep.subr.mxu0 %v437
        %596 = vmatpush1.msra.mxu0 %v436
        %597 = vmatprep.subr.mxu0 %v443
        %598 = vmatpush1.msra.mxu0 %v442
        %599 = vmatprep.subr.mxu0 %v449
        %600 = vmatpush1.msra.mxu0 %v448
        %601 = vmatprep.subr.mxu0 %v455
        %602 = vmatpush1.msra.mxu0 %v454
        %603 = vmatprep.subr.mxu0 %v461
        %604 = vmatpush1.msra.mxu0 %v460
        %605 = vmatprep.mubr.f32.mxu0 %v269
        %606 = vmatmul.mubr.f32.gmra.mrb[0].mxu0 %v268
        %v607 = vpop.f32.mrb[0].mxu0
        %v608 = vadd.f32 0.0, %v607
        %v609 = vpop.f32.mrb[0].mxu0
        %v610 = vadd.f32 0.0, %v609
        %611 = vmatprep.mubr.f32.mxu0 %v271
        %612 = vmatmul.mubr.f32.gmra.mrb[0].mxu0 %v270
        %v613 = vpop.f32.mrb[0].mxu0
        %v614 = vadd.f32 0.0, %v613
        %v615 = vpop.f32.mrb[0].mxu0
        %v616 = vadd.f32 0.0, %v615
        %617 = vdwg.mxu0
        %618 = vmatprep.subr.mxu0 %v277
        %619 = vmatpush1.msra.mxu0 %v276
        %620 = vmatprep.subr.mxu0 %v283
        %621 = vmatpush1.msra.mxu0 %v282
        %622 = vmatprep.subr.mxu0 %v289
        %623 = vmatpush1.msra.mxu0 %v288
        %624 = vmatprep.subr.mxu0 %v295
        %625 = vmatpush1.msra.mxu0 %v294
        %626 = vmatprep.subr.mxu0 %v301
        %627 = vmatpush1.msra.mxu0 %v300
        %628 = vmatprep.subr.mxu0 %v307
        %629 = vmatpush1.msra.mxu0 %v306
        %630 = vmatprep.subr.mxu0 %v313
        %631 = vmatpush1.msra.mxu0 %v312
        %632 = vmatprep.subr.mxu0 %v319
        %633 = vmatpush1.msra.mxu0 %v318
        %634 = vmatprep.subr.mxu0 %v325
        %635 = vmatpush1.msra.mxu0 %v324
        %636 = vmatprep.subr.mxu0 %v331
        %637 = vmatpush1.msra.mxu0 %v330
        %638 = vmatprep.subr.mxu0 %v337
        %639 = vmatpush1.msra.mxu0 %v336
        %640 = vmatprep.subr.mxu0 %v343
        %641 = vmatpush1.msra.mxu0 %v342
        %642 = vmatprep.subr.mxu0 %v349
        %643 = vmatpush1.msra.mxu0 %v348
        %644 = vmatprep.subr.mxu0 %v355
        %645 = vmatpush1.msra.mxu0 %v354
        %646 = vmatprep.subr.mxu0 %v361
        %647 = vmatpush1.msra.mxu0 %v360
        %648 = vmatprep.subr.mxu0 %v367
        %649 = vmatpush1.msra.mxu0 %v366
        %650 = vmatprep.subr.mxu0 %v373
        %651 = vmatpush1.msra.mxu0 %v372
        %652 = vmatprep.subr.mxu0 %v379
        %653 = vmatpush1.msra.mxu0 %v378
        %654 = vmatprep.subr.mxu0 %v385
        %655 = vmatpush1.msra.mxu0 %v384
        %656 = vmatprep.subr.mxu0 %v391
        %657 = vmatpush1.msra.mxu0 %v390
        %658 = vmatprep.subr.mxu0 %v397
        %659 = vmatpush1.msra.mxu0 %v396
        %660 = vmatprep.subr.mxu0 %v403
        %661 = vmatpush1.msra.mxu0 %v402
        %662 = vmatprep.subr.mxu0 %v409
        %663 = vmatpush1.msra.mxu0 %v408
        %664 = vmatprep.subr.mxu0 %v415
        %665 = vmatpush1.msra.mxu0 %v414
        %666 = vmatprep.subr.mxu0 %v421
        %667 = vmatpush1.msra.mxu0 %v420
        %668 = vmatprep.subr.mxu0 %v427
        %669 = vmatpush1.msra.mxu0 %v426
        %670 = vmatprep.subr.mxu0 %v433
        %671 = vmatpush1.msra.mxu0 %v432
        %672 = vmatprep.subr.mxu0 %v439
        %673 = vmatpush1.msra.mxu0 %v438
        %674 = vmatprep.subr.mxu0 %v445
        %675 = vmatpush1.msra.mxu0 %v444
        %676 = vmatprep.subr.mxu0 %v451
        %677 = vmatpush1.msra.mxu0 %v450
        %678 = vmatprep.subr.mxu0 %v457
        %679 = vmatpush1.msra.mxu0 %v456
        %680 = vmatprep.subr.mxu0 %v463
        %681 = vmatpush1.msra.mxu0 %v462
        %682 = vmatprep.mubr.f32.mxu0 %v269
        %683 = vmatmul.mubr.f32.gmra.mrb[0].mxu0 %v268
        %v684 = vpop.f32.mrb[0].mxu0
        %v685 = vadd.f32 0.0, %v684
        %v686 = vpop.f32.mrb[0].mxu0
        %v687 = vadd.f32 0.0, %v686
        %688 = vmatprep.mubr.f32.mxu0 %v271
        %689 = vmatmul.mubr.f32.gmra.mrb[0].mxu0 %v270
        %v690 = vpop.f32.mrb[0].mxu0
        %v691 = vadd.f32 0.0, %v690
        %v692 = vpop.f32.mrb[0].mxu0
        %v693 = vadd.f32 0.0, %v692
        %694 = vdwg.mxu0
        %v695 = vxor.u32 %v531, 2147483648
        %v696 = vxor.u32 %v533, 2147483648
        %v697 = vxor.u32 %v608, 2147483648
        %v698 = vxor.u32 %v537, 2147483648
        %v699 = vxor.u32 %v539, 2147483648
        %v700 = vxor.u32 %v614, 2147483648
        %v701 = vmul.f32 %v695, 1.442695
        %v702 = vpow.pop %v701
        %v703 = vmul.f32 %v696, 1.442695
        %v704 = vpow.pop %v703
        %v705 = vmul.f32 %v697, 1.442695
        %v706 = vpow.pop %v705
        %v707 = vmul.f32 %v698, 1.442695
        %v708 = vpow.pop %v707
        %v709 = vmul.f32 %v699, 1.442695
        %v710 = vpow.pop %v709
        %v711 = vmul.f32 %v700, 1.442695
        %v712 = vpow.pop %v711
        %v713 = vadd.f32 %v702, 1.0
        %v714 = vadd.f32 %v704, 1.0
        %v715 = vadd.f32 %v706, 1.0
        %v716 = vadd.f32 %v708, 1.0
        %v717 = vadd.f32 %v710, 1.0
        %v718 = vadd.f32 %v712, 1.0
        %v719 = vrcp.pop %v713
        %v720 = vmul.f32 1.0, %v719
        %v721 = vrcp.pop %v714
        %v722 = vmul.f32 1.0, %v721
        %v723 = vrcp.pop %v715
        %v724 = vmul.f32 1.0, %v723
        %v725 = vrcp.pop %v716
        %v726 = vmul.f32 1.0, %v725
        %v727 = vrcp.pop %v717
        %v728 = vmul.f32 1.0, %v727
        %v729 = vrcp.pop %v718
        %v730 = vmul.f32 1.0, %v729
        %v731 = vmul.f32 %v531, %v720
        %v732 = vmul.f32 %v533, %v722
        %v733 = vmul.f32 %v608, %v724
        %v734 = vmul.f32 %v537, %v726
        %v735 = vmul.f32 %v539, %v728
        %v736 = vmul.f32 %v614, %v730
        %v737 = vmul.f32 %v731, %v610
        %v738 = vmul.f32 %v732, %v685
        %v739 = vmul.f32 %v733, %v687
        %v740 = vmul.f32 %v734, %v616
        %v741 = vmul.f32 %v735, %v691
        %v742 = vmul.f32 %v736, %v693
        %v743 = vld [vmem:[#allocation2] sm:$0xff]
        %v744 = vld [vmem:[#allocation2 + $0x8] sm:$0xff]
        %v745 = vld [vmem:[#allocation2 + $0x10] sm:$0xff]
        %v746 = vld [vmem:[#allocation2 + $0x18] sm:$0xff]
        %v747 = vld [vmem:[%s233] sm:$0xff]
        %v748 = vld [vmem:[%s233 + $0x8] sm:$0xff]
        %v749 = vld [vmem:[%s233 + $0x10] sm:$0xff]
        %v750 = vld [vmem:[%s233 + $0x18] sm:$0xff]
        %v751 = vld [vmem:[%s233 + $0x20] sm:$0xff]
        %v752 = vld [vmem:[%s233 + $0x28] sm:$0xff]
        %v753 = vld [vmem:[%s233 + $0x30] sm:$0xff]
        %v754 = vld [vmem:[%s233 + $0x38] sm:$0xff]
        %v755 = vld [vmem:[%s233 + $0x40] sm:$0xff]
        %v756 = vld [vmem:[%s233 + $0x48] sm:$0xff]
        %v757 = vld [vmem:[%s233 + $0x50] sm:$0xff]
        %v758 = vld [vmem:[%s233 + $0x58] sm:$0xff]
        %v759 = vld [vmem:[%s233 + $0x60] sm:$0xff]
        %v760 = vld [vmem:[%s233 + $0x68] sm:$0xff]
        %v761 = vld [vmem:[%s233 + $0x70] sm:$0xff]
        %v762 = vld [vmem:[%s233 + $0x78] sm:$0xff]
        %v763 = vld [vmem:[%s233 + $0x80] sm:$0xff]
        %v764 = vld [vmem:[%s233 + $0x88] sm:$0xff]
        %v765 = vld [vmem:[%s233 + $0x90] sm:$0xff]
        %v766 = vld [vmem:[%s233 + $0x98] sm:$0xff]
        %v767 = vld [vmem:[%s233 + $0xa0] sm:$0xff]
        %v768 = vld [vmem:[%s233 + $0xa8] sm:$0xff]
        %v769 = vld [vmem:[%s233 + $0xb0] sm:$0xff]
        %v770 = vld [vmem:[%s233 + $0xb8] sm:$0xff]
        %v771 = vld [vmem:[%s233 + $0xc0] sm:$0xff]
        %v772 = vld [vmem:[%s233 + $0xc8] sm:$0xff]
        %v773 = vld [vmem:[%s233 + $0xd0] sm:$0xff]
        %v774 = vld [vmem:[%s233 + $0xd8] sm:$0xff]
        %v775 = vld [vmem:[%s233 + $0xe0] sm:$0xff]
        %v776 = vld [vmem:[%s233 + $0xe8] sm:$0xff]
        %v777 = vld [vmem:[%s233 + $0xf0] sm:$0xff]
        %v778 = vld [vmem:[%s233 + $0xf8] sm:$0xff]
        %v779 = vld [vmem:[%s233 + $0x100] sm:$0xff]
        %v780 = vld [vmem:[%s233 + $0x108] sm:$0xff]
        %v781 = vld [vmem:[%s233 + $0x110] sm:$0xff]
        %v782 = vld [vmem:[%s233 + $0x118] sm:$0xff]
        %v783 = vld [vmem:[%s233 + $0x120] sm:$0xff]
        %v784 = vld [vmem:[%s233 + $0x128] sm:$0xff]
        %v785 = vld [vmem:[%s233 + $0x130] sm:$0xff]
        %v786 = vld [vmem:[%s233 + $0x138] sm:$0xff]
        %v787 = vld [vmem:[%s233 + $0x140] sm:$0xff]
        %v788 = vld [vmem:[%s233 + $0x148] sm:$0xff]
        %v789 = vld [vmem:[%s233 + $0x150] sm:$0xff]
        %v790 = vld [vmem:[%s233 + $0x158] sm:$0xff]
        %v791 = vld [vmem:[%s233 + $0x160] sm:$0xff]
        %v792 = vld [vmem:[%s233 + $0x168] sm:$0xff]
        %v793 = vld [vmem:[%s233 + $0x170] sm:$0xff]
        %v794 = vld [vmem:[%s233 + $0x178] sm:$0xff]
        %v795 = vld [vmem:[%s233 + $0x180] sm:$0xff]
        %v796 = vld [vmem:[%s233 + $0x188] sm:$0xff]
        %v797 = vld [vmem:[%s233 + $0x190] sm:$0xff]
        %v798 = vld [vmem:[%s233 + $0x198] sm:$0xff]
        %v799 = vld [vmem:[%s233 + $0x1a0] sm:$0xff]
        %v800 = vld [vmem:[%s233 + $0x1a8] sm:$0xff]
        %v801 = vld [vmem:[%s233 + $0x1b0] sm:$0xff]
        %v802 = vld [vmem:[%s233 + $0x1b8] sm:$0xff]
        %v803 = vld [vmem:[%s233 + $0x1c0] sm:$0xff]
        %v804 = vld [vmem:[%s233 + $0x1c8] sm:$0xff]
        %v805 = vld [vmem:[%s233 + $0x1d0] sm:$0xff]
        %v806 = vld [vmem:[%s233 + $0x1d8] sm:$0xff]
        %v807 = vld [vmem:[%s233 + $0x1e0] sm:$0xff]
        %v808 = vld [vmem:[%s233 + $0x1e8] sm:$0xff]
        %v809 = vld [vmem:[%s233 + $0x1f0] sm:$0xff]
        %v810 = vld [vmem:[%s233 + $0x1f8] sm:$0xff]
        %v811 = vld [vmem:[%s233 + $0x200] sm:$0xff]
        %v812 = vld [vmem:[%s233 + $0x208] sm:$0xff]
        %v813 = vld [vmem:[%s233 + $0x210] sm:$0xff]
        %v814 = vld [vmem:[%s233 + $0x218] sm:$0xff]
        %v815 = vld [vmem:[%s233 + $0x220] sm:$0xff]
        %v816 = vld [vmem:[%s233 + $0x228] sm:$0xff]
        %v817 = vld [vmem:[%s233 + $0x230] sm:$0xff]
        %v818 = vld [vmem:[%s233 + $0x238] sm:$0xff]
        %v819 = vld [vmem:[%s233 + $0x240] sm:$0xff]
        %v820 = vld [vmem:[%s233 + $0x248] sm:$0xff]
        %v821 = vld [vmem:[%s233 + $0x250] sm:$0xff]
        %v822 = vld [vmem:[%s233 + $0x258] sm:$0xff]
        %v823 = vld [vmem:[%s233 + $0x260] sm:$0xff]
        %v824 = vld [vmem:[%s233 + $0x268] sm:$0xff]
        %v825 = vld [vmem:[%s233 + $0x270] sm:$0xff]
        %v826 = vld [vmem:[%s233 + $0x278] sm:$0xff]
        %v827 = vld [vmem:[%s233 + $0x280] sm:$0xff]
        %v828 = vld [vmem:[%s233 + $0x288] sm:$0xff]
        %v829 = vld [vmem:[%s233 + $0x290] sm:$0xff]
        %v830 = vld [vmem:[%s233 + $0x298] sm:$0xff]
        %v831 = vld [vmem:[%s233 + $0x2a0] sm:$0xff]
        %v832 = vld [vmem:[%s233 + $0x2a8] sm:$0xff]
        %v833 = vld [vmem:[%s233 + $0x2b0] sm:$0xff]
        %v834 = vld [vmem:[%s233 + $0x2b8] sm:$0xff]
        %v835 = vld [vmem:[%s233 + $0x2c0] sm:$0xff]
        %v836 = vld [vmem:[%s233 + $0x2c8] sm:$0xff]
        %v837 = vld [vmem:[%s233 + $0x2d0] sm:$0xff]
        %v838 = vld [vmem:[%s233 + $0x2d8] sm:$0xff]
        %v839 = vld [vmem:[%s233 + $0x2e0] sm:$0xff]
        %v840 = vld [vmem:[%s233 + $0x2e8] sm:$0xff]
        %v841 = vld [vmem:[%s233 + $0x2f0] sm:$0xff]
        %v842 = vld [vmem:[%s233 + $0x2f8] sm:$0xff]
        %843 = vmatprep.subr.mxu0 %v748
        %844 = vmatpush1.msra.mxu0 %v747
        %845 = vmatprep.subr.mxu0 %v750
        %846 = vmatpush1.msra.mxu0 %v749
        %847 = vmatprep.subr.mxu0 %v752
        %848 = vmatpush1.msra.mxu0 %v751
        %849 = vmatprep.subr.mxu0 %v754
        %850 = vmatpush1.msra.mxu0 %v753
        %851 = vmatprep.subr.mxu0 %v756
        %852 = vmatpush1.msra.mxu0 %v755
        %853 = vmatprep.subr.mxu0 %v758
        %854 = vmatpush1.msra.mxu0 %v757
        %855 = vmatprep.subr.mxu0 %v760
        %856 = vmatpush1.msra.mxu0 %v759
        %857 = vmatprep.subr.mxu0 %v762
        %858 = vmatpush1.msra.mxu0 %v761
        %859 = vmatprep.subr.mxu0 %v764
        %860 = vmatpush1.msra.mxu0 %v763
        %861 = vmatprep.subr.mxu0 %v766
        %862 = vmatpush1.msra.mxu0 %v765
        %863 = vmatprep.subr.mxu0 %v768
        %864 = vmatpush1.msra.mxu0 %v767
        %865 = vmatprep.subr.mxu0 %v770
        %866 = vmatpush1.msra.mxu0 %v769
        %867 = vmatprep.subr.mxu0 %v772
        %868 = vmatpush1.msra.mxu0 %v771
        %869 = vmatprep.subr.mxu0 %v774
        %870 = vmatpush1.msra.mxu0 %v773
        %871 = vmatprep.subr.mxu0 %v776
        %872 = vmatpush1.msra.mxu0 %v775
        %873 = vmatprep.subr.mxu0 %v778
        %874 = vmatpush1.msra.mxu0 %v777
        %875 = vmatprep.subr.mxu0 %v780
        %876 = vmatpush1.msra.mxu0 %v779
        %877 = vmatprep.subr.mxu0 %v782
        %878 = vmatpush1.msra.mxu0 %v781
        %879 = vmatprep.subr.mxu0 %v784
        %880 = vmatpush1.msra.mxu0 %v783
        %881 = vmatprep.subr.mxu0 %v786
        %882 = vmatpush1.msra.mxu0 %v785
        %883 = vmatprep.subr.mxu0 %v788
        %884 = vmatpush1.msra.mxu0 %v787
        %885 = vmatprep.subr.mxu0 %v790
        %886 = vmatpush1.msra.mxu0 %v789
        %887 = vmatprep.subr.mxu0 %v792
        %888 = vmatpush1.msra.mxu0 %v791
        %889 = vmatprep.subr.mxu0 %v794
        %890 = vmatpush1.msra.mxu0 %v793
        %891 = vmatprep.subr.mxu0 %v796
        %892 = vmatpush1.msra.mxu0 %v795
        %893 = vmatprep.subr.mxu0 %v798
        %894 = vmatpush1.msra.mxu0 %v797
        %895 = vmatprep.subr.mxu0 %v800
        %896 = vmatpush1.msra.mxu0 %v799
        %897 = vmatprep.subr.mxu0 %v802
        %898 = vmatpush1.msra.mxu0 %v801
        %899 = vmatprep.subr.mxu0 %v804
        %900 = vmatpush1.msra.mxu0 %v803
        %901 = vmatprep.subr.mxu0 %v806
        %902 = vmatpush1.msra.mxu0 %v805
        %903 = vmatprep.subr.mxu0 %v808
        %904 = vmatpush1.msra.mxu0 %v807
        %905 = vmatprep.subr.mxu0 %v810
        %906 = vmatpush1.msra.mxu0 %v809
        %907 = vmatprep.mubr.f32.mxu0 %v738
        %908 = vmatmul.mubr.f32.gmra.mrb[0].mxu0 %v737
        %v909 = vpop.f32.mrb[0].mxu0
        %v910 = vadd.f32 0.0, %v909
        %v911 = vpop.f32.mrb[0].mxu0
        %v912 = vadd.f32 0.0, %v911
        %913 = vmatprep.mubr.f32.mxu0 %v741
        %914 = vmatmul.mubr.f32.gmra.mrb[0].mxu0 %v740
        %v915 = vpop.f32.mrb[0].mxu0
        %v916 = vadd.f32 0.0, %v915
        %v917 = vpop.f32.mrb[0].mxu0
        %v918 = vadd.f32 0.0, %v917
        %919 = vdwg.mxu0
        %920 = vmatprep.subr.mxu0 %v812
        %921 = vmatpush1.msra.mxu0 %v811
        %922 = vmatprep.subr.mxu0 %v814
        %923 = vmatpush1.msra.mxu0 %v813
        %924 = vmatprep.subr.mxu0 %v816
        %925 = vmatpush1.msra.mxu0 %v815
        %926 = vmatprep.subr.mxu0 %v818
        %927 = vmatpush1.msra.mxu0 %v817
        %928 = vmatprep.subr.mxu0 %v820
        %929 = vmatpush1.msra.mxu0 %v819
        %930 = vmatprep.subr.mxu0 %v822
        %931 = vmatpush1.msra.mxu0 %v821
        %932 = vmatprep.subr.mxu0 %v824
        %933 = vmatpush1.msra.mxu0 %v823
        %934 = vmatprep.subr.mxu0 %v826
        %935 = vmatpush1.msra.mxu0 %v825
        %936 = vmatprep.subr.mxu0 %v828
        %937 = vmatpush1.msra.mxu0 %v827
        %938 = vmatprep.subr.mxu0 %v830
        %939 = vmatpush1.msra.mxu0 %v829
        %940 = vmatprep.subr.mxu0 %v832
        %941 = vmatpush1.msra.mxu0 %v831
        %942 = vmatprep.subr.mxu0 %v834
        %943 = vmatpush1.msra.mxu0 %v833
        %944 = vmatprep.subr.mxu0 %v836
        %945 = vmatpush1.msra.mxu0 %v835
        %946 = vmatprep.subr.mxu0 %v838
        %947 = vmatpush1.msra.mxu0 %v837
        %948 = vmatprep.subr.mxu0 %v840
        %949 = vmatpush1.msra.mxu0 %v839
        %950 = vmatprep.subr.mxu0 %v842
        %951 = vmatpush1.msra.mxu0 %v841
        %952 = vmatprep.subr.mxu0 0.0
        %953 = vmatpush1.msra.mxu0 0.0
        %954 = vmatprep.subr.mxu0 0.0
        %955 = vmatpush1.msra.mxu0 0.0
        %956 = vmatprep.subr.mxu0 0.0
        %957 = vmatpush1.msra.mxu0 0.0
        %958 = vmatprep.subr.mxu0 0.0
        %959 = vmatpush1.msra.mxu0 0.0
        %960 = vmatprep.subr.mxu0 0.0
        %961 = vmatpush1.msra.mxu0 0.0
        %962 = vmatprep.subr.mxu0 0.0
        %963 = vmatpush1.msra.mxu0 0.0
        %964 = vmatprep.subr.mxu0 0.0
        %965 = vmatpush1.msra.mxu0 0.0
        %966 = vmatprep.subr.mxu0 0.0
        %967 = vmatpush1.msra.mxu0 0.0
        %968 = vmatprep.subr.mxu0 0.0
        %969 = vmatpush1.msra.mxu0 0.0
        %970 = vmatprep.subr.mxu0 0.0
        %971 = vmatpush1.msra.mxu0 0.0
        %972 = vmatprep.subr.mxu0 0.0
        %973 = vmatpush1.msra.mxu0 0.0
        %974 = vmatprep.subr.mxu0 0.0
        %975 = vmatpush1.msra.mxu0 0.0
        %976 = vmatprep.subr.mxu0 0.0
        %977 = vmatpush1.msra.mxu0 0.0
        %978 = vmatprep.subr.mxu0 0.0
        %979 = vmatpush1.msra.mxu0 0.0
        %980 = vmatprep.subr.mxu0 0.0
        %981 = vmatpush1.msra.mxu0 0.0
        %982 = vmatprep.subr.mxu0 0.0
        %983 = vmatpush1.msra.mxu0 0.0
        %984 = vmatprep.mubr.f32.mxu0 0.0
        %985 = vmatmul.mubr.f32.gmra.mrb[0].mxu0 %v739
        %v986 = vpop.f32.mrb[0].mxu0
        %v987 = vadd.f32 %v910, %v986
        %v988 = vpop.f32.mrb[0].mxu0
        %v989 = vadd.f32 %v912, %v988
        %990 = vmatprep.mubr.f32.mxu0 0.0
        %991 = vmatmul.mubr.f32.gmra.mrb[0].mxu0 %v742
        %v992 = vpop.f32.mrb[0].mxu0
        %v993 = vadd.f32 %v916, %v992
        %v994 = vpop.f32.mrb[0].mxu0
        %v995 = vadd.f32 %v918, %v994
        %996 = vdwg.mxu0
        %v997 = vadd.f32 %v743, %v987
        %v998 = vadd.f32 %v744, %v989
        %v999 = vadd.f32 %v745, %v993
        %v1000 = vadd.f32 %v746, %v995
        %1001 = vst [vmem:[#allocation2] sm:$0xff] %v997
        %1002 = vst [vmem:[#allocation2 + $0x8] sm:$0xff] %v998
        %1003 = vst [vmem:[#allocation2 + $0x10] sm:$0xff] %v999
        %1004 = vst [vmem:[#allocation2 + $0x18] sm:$0xff] %v1000
        %p1005 = scmp.eq.s32.totalorder %s24, 1
        // Predicated region
        $region49: #{tpu_custom_call.1} parent=31 // pred_check
          %p1006 = pneg %p1005
        $region50: #{tpu_custom_call.1} parent=31 // pred_check_branch
          %1008 = sbr.rel (%p1006) target = $region52
        $region51: #{tpu_custom_call.1} parent=31 // pred_region
          %v1009 = vld [vmem:[#allocation2] sm:$0xff]
          %v1010 = vld [vmem:[#allocation2 + $0x8] sm:$0xff]
          %v1011 = vld [vmem:[#allocation2 + $0x10] sm:$0xff]
          %v1012 = vld [vmem:[#allocation2 + $0x18] sm:$0xff]
          %1013 = vst [vmem:[#allocation9] sm:$0xff] %v1009
          %1014 = vst [vmem:[#allocation9 + $0x8] sm:$0xff] %v1010
          %1015 = vst [vmem:[#allocation9 + $0x10] sm:$0xff] %v1011
          %1016 = vst [vmem:[#allocation9 + $0x18] sm:$0xff] %v1012
        $region52: #{tpu_custom_call.1} parent=31 // pred_fallthru
          _
        // Predicated region
        $region53: #{tpu_custom_call.1} parent=31 // pred_check
          %p1017 = pneg %p127
        $region54: #{tpu_custom_call.1} parent=31 // pred_check_branch
          %1019 = sbr.rel (%p1017) target = $region56
        $region55: #{tpu_custom_call.1} parent=31 // pred_region
          %s1020 = smul.u32 2, %s23
          %s1022 = ssub.s32 512, 512
          %1023 = vsyncadd [#allocation5], %s1022
          %s1024 = smul.addr %s1020, 2
          %s1025 = smul.addr %s1024, 128
          %s1026 = scalar_lea.hbm %s3, %s1025
          %s1027 = sshll.u32 [#allocation9], 4
          %s1028 = int_to_ptr.vmem [resolvable:$true] %s1027
          %1033 = dma.vmem_to_hbm [thread:$0]  %s1028, 512, %s1026, [#allocation5], 256, 256, 16
        $region56: #{tpu_custom_call.1} parent=31 // pred_fallthru
          _
        // Predicated region
        $region57: #{tpu_custom_call.1} parent=31 // pred_check
          %p1034 = pneg %p127
        $region58: #{tpu_custom_call.1} parent=31 // pred_check_branch
          %1036 = sbr.rel (%p1034) target = $region60
        $region59: #{tpu_custom_call.1} parent=31 // pred_region
          %1037 = dma.done [#allocation5], 512
        $region60: #{tpu_custom_call.1} parent=31 // pred_fallthru
          _
      $region32: #{tpu_custom_call.1} parent=5 // pred_fallthru
        _
      %p1038 = scmp.le.s32.totalorder 2, %s14
      // Predicated region
      $region61: #{tpu_custom_call.1} parent=5 // pred_check
        %p1039 = pneg %p1038
      $region62: #{tpu_custom_call.1} parent=5 // pred_check_branch
        %1041 = sbr.rel (%p1039) target = $region64
      $region63: #{tpu_custom_call.1} parent=5 // pred_region
        %s1042 = ssub.s32 %s14, 2
      $region64: #{tpu_custom_call.1} parent=5 // pred_fallthru
        _
    $region6: #{tpu_custom_call.1} parent=1 // loop_footer
      %s18 = sadd.s32 1, %s14
    $region7: #{tpu_custom_call.1} parent=1 // loop_footer_branch
      %13 = sbr.rel target = $region3
    $region8: #{tpu_custom_call.1} parent=1 // loop_exit
      _
    %1043 = vsyncpa [#allocation4], 1
    %s1044 = scalar_lea.sflag [#allocation4], 1
    %1045 = vsyncpa %s1044, 1
    %1046 = vsyncpa [#allocation7], 1
    %s1047 = scalar_lea.sflag [#allocation7], 1
    %1048 = vsyncpa %s1047, 1
    %1049 = vsyncpa [#allocation5], 1
    %s1050 = scalar_lea.sflag [#allocation5], 1
    %1051 = vsyncpa %s1050, 1

</llo_original>
